<compile_context>
chip_gen: v5e
topology: v5e:2x2
jax: 0.10.0
libtpu: 0.0.40
codegen_flags: <defaults>
</compile_context>

<pallas_src>
import numpy as np

import jax
import jax.numpy as jnp
from jax.experimental import pallas as pl
from jax.experimental.pallas import tpu as pltpu

NEG_SLOPE = 0.01  # torch.nn.functional.leaky_relu default


def _leaky_relu(x):
    return jnp.where(x >= 0, x, NEG_SLOPE * x)


def _round_up(x, m):
    return ((x + m - 1) // m) * m


# ----------------------------------------------------------------------------
# Kernel 1a: per-layer node projections  hWl = h @ Wl,  hWr = h @ Wr.
# Hoisted out of the aggregation loop ((A@h)@Wl == A@(h@Wl)), so they run once
# per layer at full MXU utilization instead of once per row tile.
# ----------------------------------------------------------------------------
def proj_kernel(h_ref, wl_ref, wr_ref, hwl_ref, hwr_ref):
    h = h_ref[...]
    hwl_ref[...] = jnp.dot(h, wl_ref[...],
                           preferred_element_type=jnp.float32).astype(jnp.bfloat16)
    hwr_ref[...] = jnp.dot(h, wr_ref[...],
                           preferred_element_type=jnp.float32).astype(jnp.bfloat16)


# ----------------------------------------------------------------------------
# Kernel 1b: SAGE aggregation stream
#   out = leaky_relu( inv_deg * (A_{0/1} @ hWl) + hWr + bias )
# grid = (row tiles [parallel], k tiles [arbitrary, accumulate in VMEM]).
# A is streamed as int8 (exact 0/1 counts, half the bf16 HBM bytes); hWl is a
# single resident VMEM block (DMA'd once) when it fits, sliced per k step.
# ----------------------------------------------------------------------------
def _make_sage_kernel(tk, hwl_resident):
    def kernel(a_ref, hwl_ref, hwr_ref, inv_ref, b_ref, out_ref, acc_ref):
        k = pl.program_id(1)

        @pl.when(k == 0)
        def _():
            acc_ref[...] = jnp.zeros_like(acc_ref)

        # exact 0/1 counts -> bf16 operand for the MXU (f32 accumulation)
        a = a_ref[...].astype(jnp.float32).astype(jnp.bfloat16)
        if hwl_resident:
            koff = pl.multiple_of(k * tk, tk)
            hwl = hwl_ref[pl.ds(koff, tk), :]
        else:
            hwl = hwl_ref[...]
        acc_ref[...] += jnp.dot(a, hwl, preferred_element_type=jnp.float32)

        @pl.when(k == pl.num_programs(1) - 1)
        def _():
            # mean-aggregation (1/deg), root term, bias, activation
            y = (inv_ref[...] * acc_ref[...]
                 + hwr_ref[...].astype(jnp.float32) + b_ref[...])
            out_ref[...] = _leaky_relu(y).astype(out_ref.dtype)

    return kernel


def sage_layer(a_i8, inv_deg, h, wl, wr, bias, *, n_pad, tm, tk, hwl_resident):
    f_in = h.shape[1]
    f_out = wl.shape[1]

    # --- projections (one small pallas_call per layer) ---
    tmp = min(n_pad, 512)
    hwl, hwr = pl.pallas_call(
        proj_kernel,
        out_shape=(jax.ShapeDtypeStruct((n_pad, f_out), jnp.bfloat16),
                   jax.ShapeDtypeStruct((n_pad, f_out), jnp.bfloat16)),
        grid_spec=pltpu.PrefetchScalarGridSpec(
            num_scalar_prefetch=0,
            grid=(n_pad // tmp,),
            in_specs=[pl.BlockSpec((tmp, f_in), lambda i: (i, 0)),
                      pl.BlockSpec((f_in, f_out), lambda i: (0, 0)),
                      pl.BlockSpec((f_in, f_out), lambda i: (0, 0))],
            out_specs=[pl.BlockSpec((tmp, f_out), lambda i: (i, 0)),
                       pl.BlockSpec((tmp, f_out), lambda i: (i, 0))]),
        compiler_params=pltpu.CompilerParams(dimension_semantics=("parallel",)),
    )(h, wl, wr)

    # --- aggregation stream ---
    if hwl_resident:
        hwl_spec = pl.BlockSpec((n_pad, f_out), lambda i, k: (0, 0))   # resident
    else:
        hwl_spec = pl.BlockSpec((tk, f_out), lambda i, k: (k, 0))      # streamed

    vmem_limit = 16 * 1024 * 1024 + (2 * n_pad * f_out if hwl_resident else 0)

    return pl.pallas_call(
        _make_sage_kernel(tk, hwl_resident),
        out_shape=jax.ShapeDtypeStruct((n_pad, f_out), jnp.bfloat16),
        grid_spec=pltpu.PrefetchScalarGridSpec(
            num_scalar_prefetch=0,
            grid=(n_pad // tm, n_pad // tk),
            in_specs=[
                pl.BlockSpec((tm, tk), lambda i, k: (i, k)),       # A tile (int8 0/1)
                hwl_spec,                                          # h @ Wl
                pl.BlockSpec((tm, f_out), lambda i, k: (i, 0)),    # h @ Wr (self rows)
                pl.BlockSpec((tm, 1), lambda i, k: (i, 0)),        # 1/deg column
                pl.BlockSpec((1, f_out), lambda i, k: (0, 0)),     # bias
            ],
            out_specs=pl.BlockSpec((tm, f_out), lambda i, k: (i, 0)),
            scratch_shapes=[pltpu.VMEM((tm, f_out), jnp.float32)]),
        compiler_params=pltpu.CompilerParams(
            dimension_semantics=("parallel", "arbitrary"),
            vmem_limit_bytes=int(min(vmem_limit, 100 * 1024 * 1024))),
    )(a_i8, hwl, hwr, inv_deg, bias)


# ----------------------------------------------------------------------------
# Kernel 2: fused MemPooling x2 (mem1 -> leaky_relu -> mem2), whole batch block
# per grid step.  Cluster counts are padded (10->16, 1->8); padding is handled
# exactly via host-built selection matrices + a cluster mask in the softmax.
# All math in f32 with exact divides (stage is a tiny fraction of total work).
# ----------------------------------------------------------------------------
def _mem_stage(x, k_t, k_sq, sum_mat, expand_mat, conv_sel, kmask, lin_w):
    """One MemPooling stage (tau=1).  x: [B, N, C] f32 -> [B, Kp, O] f32.

    k_t [C, H*Kp]      : transposed, zero-padded keys
    k_sq [1, H*Kp]     : ||k||^2
    sum_mat [H*Kp, H]  : per-head sum over REAL clusters (replaces K=10 slicing)
    expand_mat [H, H*Kp]: broadcast per-head value back to its cluster columns
    conv_sel [H*Kp, Kp]: 1x1 conv over heads folded into a selection matmul
    kmask [1, Kp]      : 1 for real clusters, 0 for padding
    lin_w [C, O]       : Linear(bias=False), zero-padded to lane width
    """
    b, n, c = x.shape
    x2d = x.reshape(b * n, c)
    xsq = jnp.sum(x2d * x2d, axis=-1, keepdims=True)                      # [BN,1]
    kx = jnp.dot(x2d, k_t, preferred_element_type=jnp.float32)            # [BN,HKp]
    dist = jnp.maximum(k_sq + xsq - 2.0 * kx, 0.0)
    # student-t kernel; exponent -(tau+1)/2 == -1 for tau=1 (PyG default).
    # TODO(synk): a non-default tau would need a general pow here.
    t = 1.0 / (1.0 + dist)                                                # exact divide
    head_sum = jnp.dot(t, sum_mat, preferred_element_type=jnp.float32)    # [BN,H]
    t_norm = t * jnp.dot(1.0 / head_sum, expand_mat,
                         preferred_element_type=jnp.float32)
    logits = jnp.dot(t_norm, conv_sel, preferred_element_type=jnp.float32)  # [BN,Kp]
    logits = logits - jnp.max(logits, axis=-1, keepdims=True)
    e = jnp.exp(logits) * kmask                                           # drop padded clusters
    s = e / jnp.sum(e, axis=-1, keepdims=True)
    # Node-mask multiply is dropped: padded node rows of x are exactly zero,
    # so they contribute nothing to S^T @ x (identical network output).
    s3 = s.reshape(b, n, -1)
    pooled = jnp.einsum('bnk,bnc->bkc', s3, x,
                        preferred_element_type=jnp.float32)               # [B,Kp,C]
    kp = pooled.shape[1]
    out = jnp.dot(pooled.reshape(b * kp, c), lin_w,
                  preferred_element_type=jnp.float32)                     # [B*Kp,O]
    return out.reshape(b, kp, lin_w.shape[1])


def mem_fused_kernel(xd_ref,
                     k1_ref, k1sq_ref, sum1_ref, exp1_ref, sel1_ref, km1_ref, lin1_ref,
                     k2_ref, k2sq_ref, sum2_ref, exp2_ref, sel2_ref, km2_ref, lin2_ref,
                     out_ref):
    x = xd_ref[...].astype(jnp.float32)                                   # [Bblk,N,C]
    x1 = _mem_stage(x, k1_ref[...], k1sq_ref[...], sum1_ref[...], exp1_ref[...],
                    sel1_ref[...], km1_ref[...], lin1_ref[...])           # [Bblk,K1p,C]
    x1 = _leaky_relu(x1)                                                  # F.leaky_relu
    y = _mem_stage(x1, k2_ref[...], k2sq_ref[...], sum2_ref[...], exp2_ref[...],
                   sel2_ref[...], km2_ref[...], lin2_ref[...])            # [Bblk,K2p,Opad]
    out_ref[...] = y


def mem_pool_fused(x_dense, m1, m2):
    b, n, c = x_dense.shape
    bblk = 8 if (b % 8 == 0 and b >= 8) else b
    grid = (b // bblk,)
    k2p = m2["sel"].shape[1]
    out_pad = m2["lin"].shape[1]

    params = (m1["kt"], m1["k_sq"], m1["sum"], m1["expand"], m1["sel"], m1["kmask"], m1["lin"],
              m2["kt"], m2["k_sq"], m2["sum"], m2["expand"], m2["sel"], m2["kmask"], m2["lin"])

    def _full_spec(arr):
        nd = arr.ndim

        def imap(i):
            return (0,) * nd

        return pl.BlockSpec(arr.shape, imap)

    in_specs = [pl.BlockSpec((bblk, n, c), lambda i: (i, 0, 0))]
    in_specs += [_full_spec(p) for p in params]

    return pl.pallas_call(
        mem_fused_kernel,
        out_shape=jax.ShapeDtypeStruct((b, k2p, out_pad), jnp.float32),
        grid=grid,
        in_specs=in_specs,
        out_specs=pl.BlockSpec((bblk, k2p, out_pad), lambda i: (i, 0, 0)),
        compiler_params=pltpu.CompilerParams(
            dimension_semantics=("parallel",)),
    )(x_dense, *params)


# ----------------------------------------------------------------------------
# Host-side glue (numpy / plain JAX): adjacency, dense batch, parameter prep.
# ----------------------------------------------------------------------------
def build_adj(edge_index, n_pad):
    # TODO(synk): for large sparse graphs, replace this dense O(N^2) adjacency
    # with a scalar-prefetch gather / segment-sum aggregation kernel; here it
    # is host-side precompute glue.
    src = np.asarray(edge_index[0])
    dst = np.asarray(edge_index[1])
    a = np.zeros((n_pad, n_pad), np.float32)
    np.add.at(a, (dst, src), 1.0)
    deg = a.sum(axis=1, keepdims=True)
    inv_deg = np.where(deg > 0.0, 1.0 / np.maximum(deg, 1.0), 0.0).astype(np.float32)
    # exact 0/1 (edge-count) adjacency in int8: half the HBM bytes of bf16;
    # the 1/deg scaling is applied inside the kernel epilogue.
    return jnp.asarray(a, jnp.int8), jnp.asarray(inv_deg)


def to_dense_batch(h, batch_np):
    # assumes a sorted (PyG-style) batch vector
    num_graphs = int(batch_np.max()) + 1
    counts = np.bincount(batch_np, minlength=num_graphs)
    n_max = _round_up(max(int(counts.max()), 8), 8)
    ptr = np.concatenate([[0], np.cumsum(counts)])
    pos = np.arange(batch_np.shape[0]) - ptr[batch_np]
    c = h.shape[1]
    return jnp.zeros((num_graphs, n_max, c), h.dtype).at[batch_np, pos].set(h)


def _prep_mem_stage(p, *, heads, num_clusters, k_pad_to, out_pad_to):
    k_raw = np.asarray(p["k"], np.float32)                    # [H*K, C]
    conv_w = np.asarray(p["conv"], np.float32).reshape(-1)    # [H]
    lin = np.asarray(p["lin"], np.float32)                    # [C, O]
    c = k_raw.shape[1]
    kp = k_pad_to
    hkp = heads * kp
    h_of_j = np.arange(hkp) // kp
    c_of_j = np.arange(hkp) % kp
    real = c_of_j < num_clusters

    keys = np.zeros((hkp, c), np.float32)
    keys[real] = k_raw                                        # h-major, cluster-minor
    k_sq = (keys * keys).sum(axis=1).reshape(1, hkp)

    sum_mat = np.zeros((hkp, heads), np.float32)
    sum_mat[np.arange(hkp), h_of_j] = real.astype(np.float32)
    expand_mat = np.zeros((heads, hkp), np.float32)
    expand_mat[h_of_j, np.arange(hkp)] = 1.0
    conv_sel = np.zeros((hkp, kp), np.float32)
    conv_sel[np.arange(hkp), c_of_j] = np.where(real, conv_w[h_of_j], 0.0)
    kmask = (np.arange(kp) < num_clusters).astype(np.float32).reshape(1, kp)

    lin_pad = np.zeros((c, out_pad_to), np.float32)
    lin_pad[:, :lin.shape[1]] = lin

    return {
        "kt": jnp.asarray(keys.T, jnp.float32),               # [C, H*Kp]
        "k_sq": jnp.asarray(k_sq),
        "sum": jnp.asarray(sum_mat),
        "expand": jnp.asarray(expand_mat),
        "sel": jnp.asarray(conv_sel),
        "kmask": jnp.asarray(kmask),
        "lin": jnp.asarray(lin_pad, jnp.float32),
    }


def prepare_params(raw, *, num_node_features, hidden, n_actions, heads, num_clusters1):
    assert hidden % 128 == 0, "hidden must be lane-aligned (module default is 128)"
    f_pad = _round_up(num_node_features, 128)
    g = raw["gnn"]

    def pad_rows(w, rows):
        w = np.asarray(w, np.float32)
        out = np.zeros((rows, w.shape[1]), np.float32)
        out[:w.shape[0]] = w
        return out

    def bf(w):
        return jnp.asarray(np.asarray(w, np.float32), jnp.bfloat16)

    return {
        "f_pad": f_pad,
        "n_actions": n_actions,
        "wl1": jnp.asarray(pad_rows(g["wl1"], f_pad), jnp.bfloat16),
        "wr1": jnp.asarray(pad_rows(g["wr1"], f_pad), jnp.bfloat16),
        "b1": jnp.asarray(g["bl1"], jnp.float32),
        "wl2": bf(g["wl2"]), "wr2": bf(g["wr2"]), "b2": jnp.asarray(g["bl2"], jnp.float32),
        "wl3": bf(g["wl3"]), "wr3": bf(g["wr3"]), "b3": jnp.asarray(g["bl3"], jnp.float32),
        "mem1": _prep_mem_stage(raw["mem1"], heads=heads, num_clusters=num_clusters1,
                                k_pad_to=_round_up(num_clusters1, 8), out_pad_to=hidden),
        "mem2": _prep_mem_stage(raw["mem2"], heads=heads, num_clusters=1,
                                k_pad_to=8, out_pad_to=_round_up(n_actions, 128)),
    }


def _choose_tiles(n):
    n_pad = _round_up(n, 256)
    if n_pad <= 512:
        # small-graph path: split rows into 2 "parallel" blocks so both v7x
        # TensorCores get work; single k step.
        return n_pad, n_pad // 2, n_pad
    n_pad = _round_up(n, 512)
    return n_pad, 512, 512                     # 512-square tiles (~85% HBM roofline)


def sage_network_forward(x, edge_index, batch_np, prep):
    n, f = x.shape
    n_pad, tm, tk = _choose_tiles(n)
    a_i8, inv_deg = build_adj(edge_index, n_pad)
    x_p = jnp.zeros((n_pad, prep["f_pad"]), jnp.bfloat16).at[:n, :f].set(
        jnp.asarray(x, jnp.bfloat16))

    f_out = prep["wl1"].shape[1]
    # keep h@Wl resident in VMEM when it fits (<= 16 MiB), else stream k-tiles
    hwl_resident = (n_pad * f_out * 2) <= (16 * 1024 * 1024)

    h = x_p
    for (wl, wr, b) in ((prep["wl1"], prep["wr1"], prep["b1"]),
                        (prep["wl2"], prep["wr2"], prep["b2"]),
                        (prep["wl3"], prep["wr3"], prep["b3"])):
        h = sage_layer(a_i8, inv_deg, h, wl, wr, b,
                       n_pad=n_pad, tm=tm, tk=tk, hwl_resident=hwl_resident)
    # the module's outer F.leaky_relu is fused into the last layer's epilogue

    xd = to_dense_batch(h[:n], batch_np)
    out = mem_pool_fused(xd, prep["mem1"], prep["mem2"])         # [B, K2p, n_act_pad]
    return out[:, 0, :prep["n_actions"]]                         # x.squeeze(1) + unpad


# ----------------------------------------------------------------------------
# Deterministic parameter init (raw torch-module shapes, pre-transposed [in,out]).
# ----------------------------------------------------------------------------
def init_params(key, num_node_features, hidden, n_actions, heads=4, num_clusters1=10):
    ks = jax.random.split(key, 15)

    def w(k, shape, scale=0.1):
        return scale * jax.random.normal(k, shape, jnp.float32)

    gnn = {
        "wl1": w(ks[0], (num_node_features, hidden)), "bl1": w(ks[1], (1, hidden)),
        "wr1": w(ks[2], (num_node_features, hidden)),
        "wl2": w(ks[3], (hidden, hidden)), "bl2": w(ks[4], (1, hidden)),
        "wr2": w(ks[5], (hidden, hidden)),
        "wl3": w(ks[6], (hidden, hidden)), "bl3": w(ks[7], (1, hidden)),
        "wr3": w(ks[8], (hidden, hidden)),
    }
    mem1 = {
        "k": w(ks[9], (heads * num_clusters1, hidden)),   # MemPooling.k flattened
        "conv": w(ks[10], (1, heads)),                    # Conv2d(heads,1,1,bias=False)
        "lin": w(ks[11], (hidden, hidden)),               # Linear(H,H,bias=False), [in,out]
    }
    mem2 = {
        "k": w(ks[12], (heads * 1, hidden)),
        "conv": w(ks[13], (1, heads)),
        "lin": w(ks[14], (hidden, n_actions)),
    }
    return {"gnn": gnn, "mem1": mem1, "mem2": mem2}


if __name__ == "__main__":
    num_node_features = 16
    hidden = 128              # module default hidden_size (lane-dense)
    n_actions = 8
    nodes_per_graph = 8
    num_graphs = 2
    n_total = nodes_per_graph * num_graphs

    key = jax.random.PRNGKey(0)
    kx, kp = jax.random.split(key)
    x = jax.random.normal(kx, (n_total, num_node_features), jnp.float32)

    # two graphs, each a bidirectional ring of 8 nodes
    batch_np = np.repeat(np.arange(num_graphs), nodes_per_graph)
    src_list, dst_list = [], []
    for g in range(num_graphs):
        off = g * nodes_per_graph
        for i in range(nodes_per_graph):
            j = (i + 1) % nodes_per_graph
            src_list += [off + i, off + j]
            dst_list += [off + j, off + i]
    edge_index = np.stack([np.asarray(src_list), np.asarray(dst_list)])

    raw_params = init_params(kp, num_node_features, hidden, n_actions)
    prep = prepare_params(raw_params, num_node_features=num_node_features,
                          hidden=hidden, n_actions=n_actions,
                          heads=4, num_clusters1=10)

    out = sage_network_forward(x, edge_index, batch_np, prep)
    out = jax.block_until_ready(out)

    assert out.shape == (num_graphs, n_actions)
    assert bool(jnp.all(jnp.isfinite(out)))
    print("KERNEL_OK")
</pallas_src>

<mosaic_0001>
module attributes {stable_mosaic.version = 11 : i64} {
  func.func @proj_kernel(%arg0: i32, %arg1: memref<256x128xbf16, #tpu.memory_space<vmem>>, %arg2: memref<128x128xbf16, #tpu.memory_space<vmem>>, %arg3: memref<128x128xbf16, #tpu.memory_space<vmem>>, %arg4: memref<256x128xbf16, #tpu.memory_space<vmem>>, %arg5: memref<256x128xbf16, #tpu.memory_space<vmem>>) attributes {dimension_semantics = [#tpu.dimension_semantics<parallel>], iteration_bounds = array<i64: 1>, scalar_prefetch = 0 : i64, scratch_operands = 0 : i64, tpu.core_type = #tpu.core_type<tc>, window_params = [{transform_indices = @transform_0, window_bounds = array<i64: 256, 128>}, {pipeline_mode = #tpu.pipeline_mode<synchronous>, transform_indices = @transform_1, window_bounds = array<i64: 128, 128>}, {pipeline_mode = #tpu.pipeline_mode<synchronous>, transform_indices = @transform_2, window_bounds = array<i64: 128, 128>}, {transform_indices = @transform_3, window_bounds = array<i64: 256, 128>}, {transform_indices = @transform_4, window_bounds = array<i64: 256, 128>}]} {
    %c0 = arith.constant 0 : index
    %c0_0 = arith.constant 0 : index
    %0 = vector.load %arg1[%c0, %c0_0] : memref<256x128xbf16, #tpu.memory_space<vmem>>, vector<256x128xbf16>
    %c0_1 = arith.constant 0 : index
    %c0_2 = arith.constant 0 : index
    %1 = vector.load %arg2[%c0_1, %c0_2] : memref<128x128xbf16, #tpu.memory_space<vmem>>, vector<128x128xbf16>
    %cst = arith.constant dense<0.000000e+00> : vector<256x128xf32>
    %2 = tpu.matmul %0, %1, %cst {dimension_numbers = #tpu.dot_dimension_numbers<[1], [0], [0], [1], [0, 0, 1, 1], [], []>} : vector<256x128xbf16>, vector<128x128xbf16>, vector<256x128xf32> -> vector<256x128xf32>
    %3 = arith.truncf %2 : vector<256x128xf32> to vector<256x128xbf16>
    %c0_3 = arith.constant 0 : index
    %c0_4 = arith.constant 0 : index
    %4 = vector.load %arg4[%c0_3, %c0_4] : memref<256x128xbf16, #tpu.memory_space<vmem>>, vector<256x128xbf16>
    tpu.vector_store %arg4[%c0_3, %c0_4], %3 {strides = array<i32>} : memref<256x128xbf16, #tpu.memory_space<vmem>>, vector<256x128xbf16>,
    %c0_5 = arith.constant 0 : index
    %c0_6 = arith.constant 0 : index
    %5 = vector.load %arg3[%c0_5, %c0_6] : memref<128x128xbf16, #tpu.memory_space<vmem>>, vector<128x128xbf16>
    %cst_7 = arith.constant dense<0.000000e+00> : vector<256x128xf32>
    %6 = tpu.matmul %0, %5, %cst_7 {dimension_numbers = #tpu.dot_dimension_numbers<[1], [0], [0], [1], [0, 0, 1, 1], [], []>} : vector<256x128xbf16>, vector<128x128xbf16>, vector<256x128xf32> -> vector<256x128xf32>
    %7 = arith.truncf %6 : vector<256x128xf32> to vector<256x128xbf16>
    %c0_8 = arith.constant 0 : index
    %c0_9 = arith.constant 0 : index
    %8 = vector.load %arg5[%c0_8, %c0_9] : memref<256x128xbf16, #tpu.memory_space<vmem>>, vector<256x128xbf16>
    tpu.vector_store %arg5[%c0_8, %c0_9], %7 {strides = array<i32>} : memref<256x128xbf16, #tpu.memory_space<vmem>>, vector<256x128xbf16>,
    return
  }
  func.func @transform_0(%arg0: i32) -> (i32, i32) {
    %c0_i32 = arith.constant 0 : i32
    %c0_i32_0 = arith.constant 0 : i32
    return %arg0, %c0_i32 : i32, i32
  }
  func.func @transform_1(%arg0: i32) -> (i32, i32) {
    %c0_i32 = arith.constant 0 : i32
    %c0_i32_0 = arith.constant 0 : i32
    %c0_i32_1 = arith.constant 0 : i32
    return %c0_i32, %c0_i32_0 : i32, i32
  }
  func.func @transform_2(%arg0: i32) -> (i32, i32) {
    %c0_i32 = arith.constant 0 : i32
    %c0_i32_0 = arith.constant 0 : i32
    %c0_i32_1 = arith.constant 0 : i32
    return %c0_i32, %c0_i32_0 : i32, i32
  }
  func.func @transform_3(%arg0: i32) -> (i32, i32) {
    %c0_i32 = arith.constant 0 : i32
    %c0_i32_0 = arith.constant 0 : i32
    return %arg0, %c0_i32 : i32, i32
  }
  func.func @transform_4(%arg0: i32) -> (i32, i32) {
    %c0_i32 = arith.constant 0 : i32
    %c0_i32_0 = arith.constant 0 : i32
    return %arg0, %c0_i32 : i32, i32
  }
}

</mosaic_0001>

<llo_original>
// kernel: tpu_custom_call.1
$region0: #{tpu_custom_call.1}
  #allocation0 [shape = 'u32[]', space=smem, size = 0x4, offset = 0x4, fixed_abs, tag = 'smem constant byte address 0x4 - core index']
  #allocation1 [shape = 'u32[72,128]{1,0:T(1,128)}', space=vmem, size = 0x9000, scoped, tag = 'internal scratch']
  %s0 = inlined_call_operand.hbm [shape: bf16[256,128], index: 0, kind: input, shape index: {}]
  %s1 = inlined_call_operand.hbm [shape: bf16[128,128], index: 1, kind: input, shape index: {}]
  %s2 = inlined_call_operand.hbm [shape: bf16[128,128], index: 2, kind: input, shape index: {}]
  %s3 = inlined_call_operand.hbm [shape: bf16[256,128], index: 3, kind: output, shape index: {0}]
  %s4 = inlined_call_operand.hbm [shape: bf16[256,128], index: 4, kind: output, shape index: {1}]
  %5 = xla_tuple %s3, %s4
  %s6 = sld [smem:[#allocation0]]
  $region42: #{tpu_custom_call.1} parent=0
    _
  %s8 = ssub.s32 1, %s6
  %s9 = scalar_select 0, %s8, %s6
  $region1: #{tpu_custom_call.1} parent=0
    #allocation2 [shape = 'u8[65536]{0}', space=vmem, size = 0x10000, scoped, tag = 'input window, operand 0, single buffered']
    #allocation3 [shape = 's32[1]{0}', space=sflag, size = 0x4, scoped, tag = 'scoped memory for tpu_custom_call.1']
    #allocation4 [shape = 's32[1]{0}', space=sflag, size = 0x4, scoped, tag = 'scoped memory for tpu_custom_call.1']
    #allocation5 [shape = 'u8[32768]{0}', space=vmem, size = 0x8000, scoped, tag = 'input window, operand 1, single buffered']
    #allocation6 [shape = 's32[1]{0}', space=sflag, size = 0x4, scoped, tag = 'scoped memory for tpu_custom_call.1']
    #allocation7 [shape = 'u8[32768]{0}', space=vmem, size = 0x8000, scoped, tag = 'input window, operand 2, single buffered']
    #allocation8 [shape = 'u8[65536]{0}', space=vmem, size = 0x10000, scoped, tag = 'output window, operand 0, single buffered']
    #allocation9 [shape = 'u8[65536]{0}', space=vmem, size = 0x10000, scoped, tag = 'output window, operand 1, single buffered']
    #allocation10 [shape = 's32[1]{0}', space=sflag, size = 0x4, scoped, tag = 'scoped memory for tpu_custom_call.1']
    %10 = vsyncpa [#allocation3], 0
    %11 = vsyncpa [#allocation6], 0
    %12 = vsyncpa [#allocation4], 0
    %13 = vsyncpa [#allocation10], 0
    // Predicated region
    $region2: #{tpu_custom_call.1} parent=1 // pred_check
      _
    $region3: #{tpu_custom_call.1} parent=1 // pred_check_branch
      %15 = sbr.rel (0) target = $region5
    $region4: #{tpu_custom_call.1} parent=1 // pred_region
      %17 = vsyncadd [#allocation3], 0
      %s18 = sshll.u32 %s0, 4
      %s19 = int_to_ptr.hbm [resolvable:$true] %s18
      %s20 = sshll.u32 [#allocation2], 4
      %s21 = int_to_ptr.vmem [resolvable:$true] %s20
      %26 = dma.hbm_to_vmem [thread:$0]  %s19, 2048, %s21, [#allocation3], 64, 64, 4
    $region5: #{tpu_custom_call.1} parent=1 // pred_fallthru
      _
    // Predicated region
    $region6: #{tpu_custom_call.1} parent=1 // pred_check
      _
    $region7: #{tpu_custom_call.1} parent=1 // pred_check_branch
      %28 = sbr.rel (0) target = $region9
    $region8: #{tpu_custom_call.1} parent=1 // pred_region
      %30 = vsyncadd [#allocation6], 0
      %s31 = sshll.u32 %s1, 4
      %s32 = int_to_ptr.hbm [resolvable:$true] %s31
      %s33 = sshll.u32 [#allocation5], 4
      %s34 = int_to_ptr.vmem [resolvable:$true] %s33
      %39 = dma.hbm_to_vmem [thread:$0]  %s32, 1024, %s34, [#allocation6], 64, 64, 4
    $region9: #{tpu_custom_call.1} parent=1 // pred_fallthru
      _
    // Predicated region
    $region10: #{tpu_custom_call.1} parent=1 // pred_check
      _
    $region11: #{tpu_custom_call.1} parent=1 // pred_check_branch
      %41 = sbr.rel (0) target = $region13
    $region12: #{tpu_custom_call.1} parent=1 // pred_region
      %43 = vsyncadd [#allocation6], 0
      %s44 = sshll.u32 %s2, 4
      %s45 = int_to_ptr.hbm [resolvable:$true] %s44
      %s46 = sshll.u32 [#allocation7], 4
      %s47 = int_to_ptr.vmem [resolvable:$true] %s46
      %52 = dma.hbm_to_vmem [thread:$0]  %s45, 1024, %s47, [#allocation6], 64, 64, 4
    $region13: #{tpu_custom_call.1} parent=1 // pred_fallthru
      _
    // Predicated region
    $region14: #{tpu_custom_call.1} parent=1 // pred_check
      _
    $region15: #{tpu_custom_call.1} parent=1 // pred_check_branch
      %54 = sbr.rel (0) target = $region17
    $region16: #{tpu_custom_call.1} parent=1 // pred_region
      %56 = dma.done [#allocation3], 2048
    $region17: #{tpu_custom_call.1} parent=1 // pred_fallthru
      _
    // Predicated region
    $region18: #{tpu_custom_call.1} parent=1 // pred_check
      _
    $region19: #{tpu_custom_call.1} parent=1 // pred_check_branch
      %58 = sbr.rel (0) target = $region21
    $region20: #{tpu_custom_call.1} parent=1 // pred_region
      %60 = dma.done [#allocation6], 1024
    $region21: #{tpu_custom_call.1} parent=1 // pred_fallthru
      _
    // Predicated region
    $region22: #{tpu_custom_call.1} parent=1 // pred_check
      _
    $region23: #{tpu_custom_call.1} parent=1 // pred_check_branch
      %62 = sbr.rel (0) target = $region25
    $region24: #{tpu_custom_call.1} parent=1 // pred_region
      %64 = dma.done [#allocation6], 1024
    $region25: #{tpu_custom_call.1} parent=1 // pred_fallthru
      _
    %v65 = vld [vmem:[#allocation2] sm:$0xf]
    %v66 = vld [vmem:[#allocation2 + $0x4] sm:$0xf]
    %v67 = vld [vmem:[#allocation2 + $0x8] sm:$0xf]
    %v68 = vld [vmem:[#allocation2 + $0xc] sm:$0xf]
    %v69 = vld [vmem:[#allocation2 + $0x10] sm:$0xf]
    %v70 = vld [vmem:[#allocation2 + $0x14] sm:$0xf]
    %v71 = vld [vmem:[#allocation2 + $0x18] sm:$0xf]
    %v72 = vld [vmem:[#allocation2 + $0x1c] sm:$0xf]
    %v73 = vld [vmem:[#allocation2 + $0x20] sm:$0xf]
    %v74 = vld [vmem:[#allocation2 + $0x24] sm:$0xf]
    %v75 = vld [vmem:[#allocation2 + $0x28] sm:$0xf]
    %v76 = vld [vmem:[#allocation2 + $0x2c] sm:$0xf]
    %v77 = vld [vmem:[#allocation2 + $0x30] sm:$0xf]
    %v78 = vld [vmem:[#allocation2 + $0x34] sm:$0xf]
    %v79 = vld [vmem:[#allocation2 + $0x38] sm:$0xf]
    %v80 = vld [vmem:[#allocation2 + $0x3c] sm:$0xf]
    %v81 = vld [vmem:[#allocation2 + $0x40] sm:$0xf]
    %v82 = vld [vmem:[#allocation2 + $0x44] sm:$0xf]
    %v83 = vld [vmem:[#allocation2 + $0x48] sm:$0xf]
    %v84 = vld [vmem:[#allocation2 + $0x4c] sm:$0xf]
    %v85 = vld [vmem:[#allocation2 + $0x50] sm:$0xf]
    %v86 = vld [vmem:[#allocation2 + $0x54] sm:$0xf]
    %v87 = vld [vmem:[#allocation2 + $0x58] sm:$0xf]
    %v88 = vld [vmem:[#allocation2 + $0x5c] sm:$0xf]
    %v89 = vld [vmem:[#allocation2 + $0x60] sm:$0xf]
    %v90 = vld [vmem:[#allocation2 + $0x64] sm:$0xf]
    %v91 = vld [vmem:[#allocation2 + $0x68] sm:$0xf]
    %v92 = vld [vmem:[#allocation2 + $0x6c] sm:$0xf]
    %v93 = vld [vmem:[#allocation2 + $0x70] sm:$0xf]
    %v94 = vld [vmem:[#allocation2 + $0x74] sm:$0xf]
    %v95 = vld [vmem:[#allocation2 + $0x78] sm:$0xf]
    %v96 = vld [vmem:[#allocation2 + $0x7c] sm:$0xf]
    %v97 = vld [vmem:[#allocation5] sm:$0xf]
    %v98 = vld [vmem:[#allocation5 + $0x4] sm:$0xf]
    %v99 = vld [vmem:[#allocation5 + $0x8] sm:$0xf]
    %v100 = vld [vmem:[#allocation5 + $0xc] sm:$0xf]
    %v101 = vld [vmem:[#allocation5 + $0x10] sm:$0xf]
    %v102 = vld [vmem:[#allocation5 + $0x14] sm:$0xf]
    %v103 = vld [vmem:[#allocation5 + $0x18] sm:$0xf]
    %v104 = vld [vmem:[#allocation5 + $0x1c] sm:$0xf]
    %v105 = vld [vmem:[#allocation5 + $0x20] sm:$0xf]
    %v106 = vld [vmem:[#allocation5 + $0x24] sm:$0xf]
    %v107 = vld [vmem:[#allocation5 + $0x28] sm:$0xf]
    %v108 = vld [vmem:[#allocation5 + $0x2c] sm:$0xf]
    %v109 = vld [vmem:[#allocation5 + $0x30] sm:$0xf]
    %v110 = vld [vmem:[#allocation5 + $0x34] sm:$0xf]
    %v111 = vld [vmem:[#allocation5 + $0x38] sm:$0xf]
    %v112 = vld [vmem:[#allocation5 + $0x3c] sm:$0xf]
    %v145 = vunpack.c.l.b16 %v65
    %v146 = vunpack.c.l.b16 %v66
    %v147 = vunpack.c.l.b16 %v67
    %v148 = vunpack.c.l.b16 %v68
    %v149 = vunpack.c.l.b16 %v69
    %v150 = vunpack.c.l.b16 %v70
    %v151 = vunpack.c.l.b16 %v71
    %v152 = vunpack.c.l.b16 %v72
    %v153 = vunpack.c.l.b16 %v73
    %v154 = vunpack.c.l.b16 %v74
    %v155 = vunpack.c.l.b16 %v75
    %v156 = vunpack.c.l.b16 %v76
    %v157 = vunpack.c.l.b16 %v77
    %v158 = vunpack.c.l.b16 %v78
    %v159 = vunpack.c.l.b16 %v79
    %v160 = vunpack.c.l.b16 %v80
    %v161 = vunpack.c.l.b16 %v81
    %v162 = vunpack.c.l.b16 %v82
    %v163 = vunpack.c.l.b16 %v83
    %v164 = vunpack.c.l.b16 %v84
    %v165 = vunpack.c.l.b16 %v85
    %v166 = vunpack.c.l.b16 %v86
    %v167 = vunpack.c.l.b16 %v87
    %v168 = vunpack.c.l.b16 %v88
    %v169 = vunpack.c.l.b16 %v89
    %v170 = vunpack.c.l.b16 %v90
    %v171 = vunpack.c.l.b16 %v91
    %v172 = vunpack.c.l.b16 %v92
    %v173 = vunpack.c.l.b16 %v93
    %v174 = vunpack.c.l.b16 %v94
    %v175 = vunpack.c.l.b16 %v95
    %v176 = vunpack.c.l.b16 %v96
    %v177 = vpack.c.b16 %v146, %v145
    %v178 = vpack.c.b16 %v148, %v147
    %v179 = vpack.c.b16 %v150, %v149
    %v180 = vpack.c.b16 %v152, %v151
    %v181 = vpack.c.b16 %v154, %v153
    %v182 = vpack.c.b16 %v156, %v155
    %v183 = vpack.c.b16 %v158, %v157
    %v184 = vpack.c.b16 %v160, %v159
    %v185 = vpack.c.b16 %v162, %v161
    %v186 = vpack.c.b16 %v164, %v163
    %v187 = vpack.c.b16 %v166, %v165
    %v188 = vpack.c.b16 %v168, %v167
    %v189 = vpack.c.b16 %v170, %v169
    %v190 = vpack.c.b16 %v172, %v171
    %v191 = vpack.c.b16 %v174, %v173
    %v192 = vpack.c.b16 %v176, %v175
    %v225 = vunpack.c.l.b16 %v97
    %v226 = vunpack.c.l.b16 %v98
    %v227 = vunpack.c.l.b16 %v99
    %v228 = vunpack.c.l.b16 %v100
    %v229 = vunpack.c.l.b16 %v101
    %v230 = vunpack.c.l.b16 %v102
    %v231 = vunpack.c.l.b16 %v103
    %v232 = vunpack.c.l.b16 %v104
    %v233 = vunpack.c.l.b16 %v105
    %v234 = vunpack.c.l.b16 %v106
    %v235 = vunpack.c.l.b16 %v107
    %v236 = vunpack.c.l.b16 %v108
    %v237 = vunpack.c.l.b16 %v109
    %v238 = vunpack.c.l.b16 %v110
    %v239 = vunpack.c.l.b16 %v111
    %v240 = vunpack.c.l.b16 %v112
    %v241 = vpack.c.b16 %v226, %v225
    %v242 = vpack.c.b16 %v228, %v227
    %v243 = vpack.c.b16 %v230, %v229
    %v244 = vpack.c.b16 %v232, %v231
    %v245 = vpack.c.b16 %v234, %v233
    %v246 = vpack.c.b16 %v236, %v235
    %v247 = vpack.c.b16 %v238, %v237
    %v248 = vpack.c.b16 %v240, %v239
    %257 = vmatpush.bf16.msra.mxu0 %v248
    %258 = vmatpush.bf16.msra.mxu0 %v247
    %259 = vmatpush.bf16.msra.mxu0 %v246
    %260 = vmatpush.bf16.msra.mxu0 %v245
    %261 = vmatpush.bf16.msra.mxu0 %v244
    %262 = vmatpush.bf16.msra.mxu0 %v243
    %263 = vmatpush.bf16.msra.mxu0 %v242
    %264 = vmatpush.bf16.msra.mxu0 %v241
    %265 = vmatmul.bf16.gmra.mxu0 %v177
    %v266 = vpop.f32.mrf.mxu0
    %v267 = vadd.f32 0.0, %v266
    %v268 = vpop.f32.mrf.mxu0
    %v269 = vadd.f32 0.0, %v268
    %270 = vmatmul.bf16.gmra.mxu0 %v178
    %v271 = vpop.f32.mrf.mxu0
    %v272 = vadd.f32 0.0, %v271
    %v273 = vpop.f32.mrf.mxu0
    %v274 = vadd.f32 0.0, %v273
    %275 = vmatmul.bf16.gmra.mxu0 %v179
    %v276 = vpop.f32.mrf.mxu0
    %v277 = vadd.f32 0.0, %v276
    %v278 = vpop.f32.mrf.mxu0
    %v279 = vadd.f32 0.0, %v278
    %280 = vmatmul.bf16.gmra.mxu0 %v180
    %v281 = vpop.f32.mrf.mxu0
    %v282 = vadd.f32 0.0, %v281
    %v283 = vpop.f32.mrf.mxu0
    %v284 = vadd.f32 0.0, %v283
    %285 = vmatmul.bf16.gmra.mxu0 %v181
    %v286 = vpop.f32.mrf.mxu0
    %v287 = vadd.f32 0.0, %v286
    %v288 = vpop.f32.mrf.mxu0
    %v289 = vadd.f32 0.0, %v288
    %290 = vmatmul.bf16.gmra.mxu0 %v182
    %v291 = vpop.f32.mrf.mxu0
    %v292 = vadd.f32 0.0, %v291
    %v293 = vpop.f32.mrf.mxu0
    %v294 = vadd.f32 0.0, %v293
    %295 = vmatmul.bf16.gmra.mxu0 %v183
    %v296 = vpop.f32.mrf.mxu0
    %v297 = vadd.f32 0.0, %v296
    %v298 = vpop.f32.mrf.mxu0
    %v299 = vadd.f32 0.0, %v298
    %300 = vmatmul.bf16.gmra.mxu0 %v184
    %v301 = vpop.f32.mrf.mxu0
    %v302 = vadd.f32 0.0, %v301
    %v303 = vpop.f32.mrf.mxu0
    %v304 = vadd.f32 0.0, %v303
    %305 = vmatmul.bf16.gmra.mxu0 %v185
    %v306 = vpop.f32.mrf.mxu0
    %v307 = vadd.f32 0.0, %v306
    %v308 = vpop.f32.mrf.mxu0
    %v309 = vadd.f32 0.0, %v308
    %310 = vmatmul.bf16.gmra.mxu0 %v186
    %v311 = vpop.f32.mrf.mxu0
    %v312 = vadd.f32 0.0, %v311
    %v313 = vpop.f32.mrf.mxu0
    %v314 = vadd.f32 0.0, %v313
    %315 = vmatmul.bf16.gmra.mxu0 %v187
    %v316 = vpop.f32.mrf.mxu0
    %v317 = vadd.f32 0.0, %v316
    %v318 = vpop.f32.mrf.mxu0
    %v319 = vadd.f32 0.0, %v318
    %320 = vmatmul.bf16.gmra.mxu0 %v188
    %v321 = vpop.f32.mrf.mxu0
    %v322 = vadd.f32 0.0, %v321
    %v323 = vpop.f32.mrf.mxu0
    %v324 = vadd.f32 0.0, %v323
    %325 = vmatmul.bf16.gmra.mxu0 %v189
    %v326 = vpop.f32.mrf.mxu0
    %v327 = vadd.f32 0.0, %v326
    %v328 = vpop.f32.mrf.mxu0
    %v329 = vadd.f32 0.0, %v328
    %330 = vmatmul.bf16.gmra.mxu0 %v190
    %v331 = vpop.f32.mrf.mxu0
    %v332 = vadd.f32 0.0, %v331
    %v333 = vpop.f32.mrf.mxu0
    %v334 = vadd.f32 0.0, %v333
    %335 = vmatmul.bf16.gmra.mxu0 %v191
    %v336 = vpop.f32.mrf.mxu0
    %v337 = vadd.f32 0.0, %v336
    %v338 = vpop.f32.mrf.mxu0
    %v339 = vadd.f32 0.0, %v338
    %340 = vmatmul.bf16.gmra.mxu0 %v192
    %v341 = vpop.f32.mrf.mxu0
    %v342 = vadd.f32 0.0, %v341
    %v343 = vpop.f32.mrf.mxu0
    %v344 = vadd.f32 0.0, %v343
    %345 = vdwg.mxu0
    %v346 = vpack.c.bf16 %v267, %v267
    %v347 = vpack.c.bf16 %v269, %v269
    %v348 = vpack.c.bf16 %v272, %v272
    %v349 = vpack.c.bf16 %v274, %v274
    %v350 = vpack.c.bf16 %v277, %v277
    %v351 = vpack.c.bf16 %v279, %v279
    %v352 = vpack.c.bf16 %v282, %v282
    %v353 = vpack.c.bf16 %v284, %v284
    %v354 = vpack.c.bf16 %v287, %v287
    %v355 = vpack.c.bf16 %v289, %v289
    %v356 = vpack.c.bf16 %v292, %v292
    %v357 = vpack.c.bf16 %v294, %v294
    %v358 = vpack.c.bf16 %v297, %v297
    %v359 = vpack.c.bf16 %v299, %v299
    %v360 = vpack.c.bf16 %v302, %v302
    %v361 = vpack.c.bf16 %v304, %v304
    %v362 = vpack.c.bf16 %v307, %v307
    %v363 = vpack.c.bf16 %v309, %v309
    %v364 = vpack.c.bf16 %v312, %v312
    %v365 = vpack.c.bf16 %v314, %v314
    %v366 = vpack.c.bf16 %v317, %v317
    %v367 = vpack.c.bf16 %v319, %v319
    %v368 = vpack.c.bf16 %v322, %v322
    %v369 = vpack.c.bf16 %v324, %v324
    %v370 = vpack.c.bf16 %v327, %v327
    %v371 = vpack.c.bf16 %v329, %v329
    %v372 = vpack.c.bf16 %v332, %v332
    %v373 = vpack.c.bf16 %v334, %v334
    %v374 = vpack.c.bf16 %v337, %v337
    %v375 = vpack.c.bf16 %v339, %v339
    %v376 = vpack.c.bf16 %v342, %v342
    %v377 = vpack.c.bf16 %v344, %v344
    %378 = vst [vmem:[#allocation8] sm:$0xf] %v346
    %379 = vst [vmem:[#allocation8 + $0x4] sm:$0xf] %v347
    %380 = vst [vmem:[#allocation8 + $0x8] sm:$0xf] %v348
    %381 = vst [vmem:[#allocation8 + $0xc] sm:$0xf] %v349
    %382 = vst [vmem:[#allocation8 + $0x10] sm:$0xf] %v350
    %383 = vst [vmem:[#allocation8 + $0x14] sm:$0xf] %v351
    %384 = vst [vmem:[#allocation8 + $0x18] sm:$0xf] %v352
    %385 = vst [vmem:[#allocation8 + $0x1c] sm:$0xf] %v353
    %386 = vst [vmem:[#allocation8 + $0x20] sm:$0xf] %v354
    %387 = vst [vmem:[#allocation8 + $0x24] sm:$0xf] %v355
    %388 = vst [vmem:[#allocation8 + $0x28] sm:$0xf] %v356
    %389 = vst [vmem:[#allocation8 + $0x2c] sm:$0xf] %v357
    %390 = vst [vmem:[#allocation8 + $0x30] sm:$0xf] %v358
    %391 = vst [vmem:[#allocation8 + $0x34] sm:$0xf] %v359
    %392 = vst [vmem:[#allocation8 + $0x38] sm:$0xf] %v360
    %393 = vst [vmem:[#allocation8 + $0x3c] sm:$0xf] %v361
    %394 = vst [vmem:[#allocation8 + $0x40] sm:$0xf] %v362
    %395 = vst [vmem:[#allocation8 + $0x44] sm:$0xf] %v363
    %396 = vst [vmem:[#allocation8 + $0x48] sm:$0xf] %v364
    %397 = vst [vmem:[#allocation8 + $0x4c] sm:$0xf] %v365
    %398 = vst [vmem:[#allocation8 + $0x50] sm:$0xf] %v366
    %399 = vst [vmem:[#allocation8 + $0x54] sm:$0xf] %v367
    %400 = vst [vmem:[#allocation8 + $0x58] sm:$0xf] %v368
    %401 = vst [vmem:[#allocation8 + $0x5c] sm:$0xf] %v369
    %402 = vst [vmem:[#allocation8 + $0x60] sm:$0xf] %v370
    %403 = vst [vmem:[#allocation8 + $0x64] sm:$0xf] %v371
    %404 = vst [vmem:[#allocation8 + $0x68] sm:$0xf] %v372
    %405 = vst [vmem:[#allocation8 + $0x6c] sm:$0xf] %v373
    %406 = vst [vmem:[#allocation8 + $0x70] sm:$0xf] %v374
    %407 = vst [vmem:[#allocation8 + $0x74] sm:$0xf] %v375
    %408 = vst [vmem:[#allocation8 + $0x78] sm:$0xf] %v376
    %409 = vst [vmem:[#allocation8 + $0x7c] sm:$0xf] %v377
    %v410 = vld [vmem:[#allocation7] sm:$0xf]
    %v411 = vld [vmem:[#allocation7 + $0x4] sm:$0xf]
    %v412 = vld [vmem:[#allocation7 + $0x8] sm:$0xf]
    %v413 = vld [vmem:[#allocation7 + $0xc] sm:$0xf]
    %v414 = vld [vmem:[#allocation7 + $0x10] sm:$0xf]
    %v415 = vld [vmem:[#allocation7 + $0x14] sm:$0xf]
    %v416 = vld [vmem:[#allocation7 + $0x18] sm:$0xf]
    %v417 = vld [vmem:[#allocation7 + $0x1c] sm:$0xf]
    %v418 = vld [vmem:[#allocation7 + $0x20] sm:$0xf]
    %v419 = vld [vmem:[#allocation7 + $0x24] sm:$0xf]
    %v420 = vld [vmem:[#allocation7 + $0x28] sm:$0xf]
    %v421 = vld [vmem:[#allocation7 + $0x2c] sm:$0xf]
    %v422 = vld [vmem:[#allocation7 + $0x30] sm:$0xf]
    %v423 = vld [vmem:[#allocation7 + $0x34] sm:$0xf]
    %v424 = vld [vmem:[#allocation7 + $0x38] sm:$0xf]
    %v425 = vld [vmem:[#allocation7 + $0x3c] sm:$0xf]
    %v442 = vunpack.c.l.b16 %v410
    %v443 = vunpack.c.l.b16 %v411
    %v444 = vunpack.c.l.b16 %v412
    %v445 = vunpack.c.l.b16 %v413
    %v446 = vunpack.c.l.b16 %v414
    %v447 = vunpack.c.l.b16 %v415
    %v448 = vunpack.c.l.b16 %v416
    %v449 = vunpack.c.l.b16 %v417
    %v450 = vunpack.c.l.b16 %v418
    %v451 = vunpack.c.l.b16 %v419
    %v452 = vunpack.c.l.b16 %v420
    %v453 = vunpack.c.l.b16 %v421
    %v454 = vunpack.c.l.b16 %v422
    %v455 = vunpack.c.l.b16 %v423
    %v456 = vunpack.c.l.b16 %v424
    %v457 = vunpack.c.l.b16 %v425
    %v458 = vpack.c.b16 %v443, %v442
    %v459 = vpack.c.b16 %v445, %v444
    %v460 = vpack.c.b16 %v447, %v446
    %v461 = vpack.c.b16 %v449, %v448
    %v462 = vpack.c.b16 %v451, %v450
    %v463 = vpack.c.b16 %v453, %v452
    %v464 = vpack.c.b16 %v455, %v454
    %v465 = vpack.c.b16 %v457, %v456
    %474 = vmatpush.bf16.msra.mxu0 %v465
    %475 = vmatpush.bf16.msra.mxu0 %v464
    %476 = vmatpush.bf16.msra.mxu0 %v463
    %477 = vmatpush.bf16.msra.mxu0 %v462
    %478 = vmatpush.bf16.msra.mxu0 %v461
    %479 = vmatpush.bf16.msra.mxu0 %v460
    %480 = vmatpush.bf16.msra.mxu0 %v459
    %481 = vmatpush.bf16.msra.mxu0 %v458
    %482 = vmatmul.bf16.gmra.mxu0 %v177
    %v483 = vpop.f32.mrf.mxu0
    %v484 = vadd.f32 0.0, %v483
    %v485 = vpop.f32.mrf.mxu0
    %v486 = vadd.f32 0.0, %v485
    %487 = vmatmul.bf16.gmra.mxu0 %v178
    %v488 = vpop.f32.mrf.mxu0
    %v489 = vadd.f32 0.0, %v488
    %v490 = vpop.f32.mrf.mxu0
    %v491 = vadd.f32 0.0, %v490
    %492 = vmatmul.bf16.gmra.mxu0 %v179
    %v493 = vpop.f32.mrf.mxu0
    %v494 = vadd.f32 0.0, %v493
    %v495 = vpop.f32.mrf.mxu0
    %v496 = vadd.f32 0.0, %v495
    %497 = vmatmul.bf16.gmra.mxu0 %v180
    %v498 = vpop.f32.mrf.mxu0
    %v499 = vadd.f32 0.0, %v498
    %v500 = vpop.f32.mrf.mxu0
    %v501 = vadd.f32 0.0, %v500
    %502 = vmatmul.bf16.gmra.mxu0 %v181
    %v503 = vpop.f32.mrf.mxu0
    %v504 = vadd.f32 0.0, %v503
    %v505 = vpop.f32.mrf.mxu0
    %v506 = vadd.f32 0.0, %v505
    %507 = vmatmul.bf16.gmra.mxu0 %v182
    %v508 = vpop.f32.mrf.mxu0
    %v509 = vadd.f32 0.0, %v508
    %v510 = vpop.f32.mrf.mxu0
    %v511 = vadd.f32 0.0, %v510
    %512 = vmatmul.bf16.gmra.mxu0 %v183
    %v513 = vpop.f32.mrf.mxu0
    %v514 = vadd.f32 0.0, %v513
    %v515 = vpop.f32.mrf.mxu0
    %v516 = vadd.f32 0.0, %v515
    %517 = vmatmul.bf16.gmra.mxu0 %v184
    %v518 = vpop.f32.mrf.mxu0
    %v519 = vadd.f32 0.0, %v518
    %v520 = vpop.f32.mrf.mxu0
    %v521 = vadd.f32 0.0, %v520
    %522 = vmatmul.bf16.gmra.mxu0 %v185
    %v523 = vpop.f32.mrf.mxu0
    %v524 = vadd.f32 0.0, %v523
    %v525 = vpop.f32.mrf.mxu0
    %v526 = vadd.f32 0.0, %v525
    %527 = vmatmul.bf16.gmra.mxu0 %v186
    %v528 = vpop.f32.mrf.mxu0
    %v529 = vadd.f32 0.0, %v528
    %v530 = vpop.f32.mrf.mxu0
    %v531 = vadd.f32 0.0, %v530
    %532 = vmatmul.bf16.gmra.mxu0 %v187
    %v533 = vpop.f32.mrf.mxu0
    %v534 = vadd.f32 0.0, %v533
    %v535 = vpop.f32.mrf.mxu0
    %v536 = vadd.f32 0.0, %v535
    %537 = vmatmul.bf16.gmra.mxu0 %v188
    %v538 = vpop.f32.mrf.mxu0
    %v539 = vadd.f32 0.0, %v538
    %v540 = vpop.f32.mrf.mxu0
    %v541 = vadd.f32 0.0, %v540
    %542 = vmatmul.bf16.gmra.mxu0 %v189
    %v543 = vpop.f32.mrf.mxu0
    %v544 = vadd.f32 0.0, %v543
    %v545 = vpop.f32.mrf.mxu0
    %v546 = vadd.f32 0.0, %v545
    %547 = vmatmul.bf16.gmra.mxu0 %v190
    %v548 = vpop.f32.mrf.mxu0
    %v549 = vadd.f32 0.0, %v548
    %v550 = vpop.f32.mrf.mxu0
    %v551 = vadd.f32 0.0, %v550
    %552 = vmatmul.bf16.gmra.mxu0 %v191
    %v553 = vpop.f32.mrf.mxu0
    %v554 = vadd.f32 0.0, %v553
    %v555 = vpop.f32.mrf.mxu0
    %v556 = vadd.f32 0.0, %v555
    %557 = vmatmul.bf16.gmra.mxu0 %v192
    %v558 = vpop.f32.mrf.mxu0
    %v559 = vadd.f32 0.0, %v558
    %v560 = vpop.f32.mrf.mxu0
    %v561 = vadd.f32 0.0, %v560
    %562 = vdwg.mxu0
    %v563 = vpack.c.bf16 %v484, %v484
    %v564 = vpack.c.bf16 %v486, %v486
    %v565 = vpack.c.bf16 %v489, %v489
    %v566 = vpack.c.bf16 %v491, %v491
    %v567 = vpack.c.bf16 %v494, %v494
    %v568 = vpack.c.bf16 %v496, %v496
    %v569 = vpack.c.bf16 %v499, %v499
    %v570 = vpack.c.bf16 %v501, %v501
    %v571 = vpack.c.bf16 %v504, %v504
    %v572 = vpack.c.bf16 %v506, %v506
    %v573 = vpack.c.bf16 %v509, %v509
    %v574 = vpack.c.bf16 %v511, %v511
    %v575 = vpack.c.bf16 %v514, %v514
    %v576 = vpack.c.bf16 %v516, %v516
    %v577 = vpack.c.bf16 %v519, %v519
    %v578 = vpack.c.bf16 %v521, %v521
    %v579 = vpack.c.bf16 %v524, %v524
    %v580 = vpack.c.bf16 %v526, %v526
    %v581 = vpack.c.bf16 %v529, %v529
    %v582 = vpack.c.bf16 %v531, %v531
    %v583 = vpack.c.bf16 %v534, %v534
    %v584 = vpack.c.bf16 %v536, %v536
    %v585 = vpack.c.bf16 %v539, %v539
    %v586 = vpack.c.bf16 %v541, %v541
    %v587 = vpack.c.bf16 %v544, %v544
    %v588 = vpack.c.bf16 %v546, %v546
    %v589 = vpack.c.bf16 %v549, %v549
    %v590 = vpack.c.bf16 %v551, %v551
    %v591 = vpack.c.bf16 %v554, %v554
    %v592 = vpack.c.bf16 %v556, %v556
    %v593 = vpack.c.bf16 %v559, %v559
    %v594 = vpack.c.bf16 %v561, %v561
    %595 = vst [vmem:[#allocation9] sm:$0xf] %v563
    %596 = vst [vmem:[#allocation9 + $0x4] sm:$0xf] %v564
    %597 = vst [vmem:[#allocation9 + $0x8] sm:$0xf] %v565
    %598 = vst [vmem:[#allocation9 + $0xc] sm:$0xf] %v566
    %599 = vst [vmem:[#allocation9 + $0x10] sm:$0xf] %v567
    %600 = vst [vmem:[#allocation9 + $0x14] sm:$0xf] %v568
    %601 = vst [vmem:[#allocation9 + $0x18] sm:$0xf] %v569
    %602 = vst [vmem:[#allocation9 + $0x1c] sm:$0xf] %v570
    %603 = vst [vmem:[#allocation9 + $0x20] sm:$0xf] %v571
    %604 = vst [vmem:[#allocation9 + $0x24] sm:$0xf] %v572
    %605 = vst [vmem:[#allocation9 + $0x28] sm:$0xf] %v573
    %606 = vst [vmem:[#allocation9 + $0x2c] sm:$0xf] %v574
    %607 = vst [vmem:[#allocation9 + $0x30] sm:$0xf] %v575
    %608 = vst [vmem:[#allocation9 + $0x34] sm:$0xf] %v576
    %609 = vst [vmem:[#allocation9 + $0x38] sm:$0xf] %v577
    %610 = vst [vmem:[#allocation9 + $0x3c] sm:$0xf] %v578
    %611 = vst [vmem:[#allocation9 + $0x40] sm:$0xf] %v579
    %612 = vst [vmem:[#allocation9 + $0x44] sm:$0xf] %v580
    %613 = vst [vmem:[#allocation9 + $0x48] sm:$0xf] %v581
    %614 = vst [vmem:[#allocation9 + $0x4c] sm:$0xf] %v582
    %615 = vst [vmem:[#allocation9 + $0x50] sm:$0xf] %v583
    %616 = vst [vmem:[#allocation9 + $0x54] sm:$0xf] %v584
    %617 = vst [vmem:[#allocation9 + $0x58] sm:$0xf] %v585
    %618 = vst [vmem:[#allocation9 + $0x5c] sm:$0xf] %v586
    %619 = vst [vmem:[#allocation9 + $0x60] sm:$0xf] %v587
    %620 = vst [vmem:[#allocation9 + $0x64] sm:$0xf] %v588
    %621 = vst [vmem:[#allocation9 + $0x68] sm:$0xf] %v589
    %622 = vst [vmem:[#allocation9 + $0x6c] sm:$0xf] %v590
    %623 = vst [vmem:[#allocation9 + $0x70] sm:$0xf] %v591
    %624 = vst [vmem:[#allocation9 + $0x74] sm:$0xf] %v592
    %625 = vst [vmem:[#allocation9 + $0x78] sm:$0xf] %v593
    %626 = vst [vmem:[#allocation9 + $0x7c] sm:$0xf] %v594
    // Predicated region
    $region26: #{tpu_custom_call.1} parent=1 // pred_check
      _
    $region27: #{tpu_custom_call.1} parent=1 // pred_check_branch
      %628 = sbr.rel (0) target = $region29
    $region28: #{tpu_custom_call.1} parent=1 // pred_region
      %630 = vsyncadd [#allocation4], 0
      %s631 = sshll.u32 [#allocation8], 4
      %s632 = int_to_ptr.vmem [resolvable:$true] %s631
      %s633 = sshll.u32 %s3, 4
      %s634 = int_to_ptr.hbm [resolvable:$true] %s633
      %639 = dma.vmem_to_hbm [thread:$0]  %s632, 2048, %s634, [#allocation4], 64, 64, 4
    $region29: #{tpu_custom_call.1} parent=1 // pred_fallthru
      _
    // Predicated region
    $region30: #{tpu_custom_call.1} parent=1 // pred_check
      _
    $region31: #{tpu_custom_call.1} parent=1 // pred_check_branch
      %641 = sbr.rel (0) target = $region33
    $region32: #{tpu_custom_call.1} parent=1 // pred_region
      %643 = vsyncadd [#allocation10], 0
      %s644 = sshll.u32 [#allocation9], 4
      %s645 = int_to_ptr.vmem [resolvable:$true] %s644
      %s646 = sshll.u32 %s4, 4
      %s647 = int_to_ptr.hbm [resolvable:$true] %s646
      %652 = dma.vmem_to_hbm [thread:$0]  %s645, 2048, %s647, [#allocation10], 64, 64, 4
    $region33: #{tpu_custom_call.1} parent=1 // pred_fallthru
      _
    // Predicated region
    $region34: #{tpu_custom_call.1} parent=1 // pred_check
      _
    $region35: #{tpu_custom_call.1} parent=1 // pred_check_branch
      %654 = sbr.rel (0) target = $region37
    $region36: #{tpu_custom_call.1} parent=1 // pred_region
      %656 = dma.done [#allocation4], 2048
    $region37: #{tpu_custom_call.1} parent=1 // pred_fallthru
      _
    // Predicated region
    $region38: #{tpu_custom_call.1} parent=1 // pred_check
      _
    $region39: #{tpu_custom_call.1} parent=1 // pred_check_branch
      %658 = sbr.rel (0) target = $region41
    $region40: #{tpu_custom_call.1} parent=1 // pred_region
      %660 = dma.done [#allocation10], 2048
    $region41: #{tpu_custom_call.1} parent=1 // pred_fallthru
      _
    %661 = vsyncpa [#allocation3], 1
    %662 = vsyncpa [#allocation6], 1
    %663 = vsyncpa [#allocation4], 1
    %664 = vsyncpa [#allocation10], 1

</llo_original>
